<compile_context>
chip_gen: v7x
topology: tpu7x:2x2x1
jax: 0.10.0
libtpu: 0.0.40
codegen_flags: <defaults>
</compile_context>

<pallas_src>
import functools

import numpy as np
import jax
import jax.numpy as jnp
from jax.experimental import pallas as pl
from jax.experimental.pallas import tpu as pltpu

N_HIDDEN = 128
N_COORDS = 2
BN_EPS = 1e-5


def _fx_kernel(data_ref, mask_ref, s1_ref, b1_ref, a_ref, b2_ref, w2_ref,
               out_ref, *, slen_p):
    rows, nfeat = data_ref.shape
    cdt = a_ref.dtype

    # masked BatchNorm1d (eval affine) + masked_fill(0)
    x = (data_ref[...].astype(jnp.float32) * s1_ref[...] + b1_ref[...]) * mask_ref[...]

    # sequence-shifted copies via XLU sublane rotation; iota-derived edge masks zero
    # rows whose rolled source row belongs to a different sequence (or wraps).
    pos = jax.lax.broadcasted_iota(jnp.int32, (rows, 1), 0) % slen_p
    not_last = (pos < slen_p - 1).astype(jnp.float32)
    not_first = (pos > 0).astype(jnp.float32)
    x_next = pltpu.roll(x, rows - 1, axis=0) * not_last      # x[r+1]
    x_prev = pltpu.roll(x, 1, axis=0) * not_first            # x[r-1]

    # three accumulating MXU matmuls: ConvTranspose2d seq taps with stem_linear1 and
    # the BN2 scale folded into the (3*nfeat, NPAD) weight matrix.
    y = jnp.dot(x_next.astype(cdt), a_ref[0:nfeat, :],
                preferred_element_type=jnp.float32)
    y += jnp.dot(x.astype(cdt), a_ref[nfeat:2 * nfeat, :],
                 preferred_element_type=jnp.float32)
    y += jnp.dot(x_prev.astype(cdt), a_ref[2 * nfeat:3 * nfeat, :],
                 preferred_element_type=jnp.float32)

    # BN2 shift + SiLU (f32), then final_linear; lane-dense writeback in out dtype.
    z = y + b2_ref[...]
    z = z * jax.nn.sigmoid(z)
    out = jnp.dot(z.astype(w2_ref.dtype), w2_ref[...],
                  preferred_element_type=jnp.float32)
    out_ref[...] = out.astype(out_ref.dtype)


def feature_extractor_transposed(data, mask, params, n_landmarks,
                                 compute_dtype=jnp.bfloat16):
    bs, slen, nfeat = data.shape
    L2 = n_landmarks // 2
    F = L2 * 32
    NLNC = n_landmarks * N_COORDS
    NPAD = ((NLNC + 127) // 128) * 128            # lane-dense padded output width
    f32 = jnp.float32

    # ---- BatchNorm1d (eval) folded into a per-feature affine ----
    inv1 = params["gamma1"] / jnp.sqrt(params["var1"] + BN_EPS)
    s1 = inv1.reshape(1, nfeat).astype(f32)
    b1 = (params["beta1"] - params["mean1"] * inv1).reshape(1, nfeat).astype(f32)

    # ---- fold ConvTranspose2d W-axis into M[kh]: (F, NLNC) ----
    # output column wo*2+co pulls from input column wi iff wo + 1 - kw == 2*wi.
    T = np.zeros((L2, n_landmarks, 3), np.float32)
    for wo in range(n_landmarks):
        for kw in range(3):
            num = wo + 1 - kw
            if num % 2 == 0 and 0 <= num // 2 < L2:
                T[num // 2, wo, kw] = 1.0
    wc = params["Wc"].astype(f32)                                    # (32, 2, 3, 3) = (ci, co, kh, kw)
    M = jnp.einsum("iwk,cohk->hicwo", jnp.asarray(T), wc).reshape(3, F, NLNC)

    # ---- fold stem_linear1 and the BN2 (eval) scale into the conv matrices ----
    inv2 = params["gamma2"] / jnp.sqrt(params["var2"] + BN_EPS)      # (2,)
    s2col = jnp.tile(inv2, n_landmarks)                               # column o = o % 2
    b2col = jnp.tile(params["beta2"] - params["mean2"] * inv2, n_landmarks)
    A = jnp.einsum("fn,hfo->hno", params["W1"].astype(f32), M) * s2col[None, None, :]

    A_cat = jnp.zeros((3, nfeat, NPAD), f32).at[:, :, :NLNC].set(A)
    A_cat = A_cat.reshape(3 * nfeat, NPAD).astype(compute_dtype)      # (384, NPAD)
    b2 = jnp.zeros((1, NPAD), f32).at[:, :NLNC].set(b2col.reshape(1, NLNC))
    W2t = jnp.zeros((NPAD, NPAD), f32).at[:NLNC, :NLNC].set(params["W2"].astype(f32).T)
    W2t = W2t.astype(compute_dtype)

    # ---- tiling: whole (padded) sequences per grid step ----
    slen_p = ((slen + 15) // 16) * 16            # 16-row granularity works for f32 & bf16 blocks
    ROW_CAP = 1024                                # rows per step (amortize ~0.35us step overhead)
    b_tile = max(1, min(bs, ROW_CAP // slen_p))
    n_tiles = -(-bs // b_tile)
    if n_tiles < 2 and bs >= 2:                   # keep >=2 grid steps so v7x megacore can shard
        b_tile = (bs + 1) // 2
        n_tiles = -(-bs // b_tile)
    bs_p = n_tiles * b_tile
    r_tile = b_tile * slen_p
    rows_p = bs_p * slen_p
    assert r_tile % slen_p == 0, "tile boundary must coincide with sequence boundary"

    # inputs stay f32 (kernel promotes to f32 for BN1 anyway -> no extra HBM cast pass)
    data_p = data.astype(f32)
    mask_p = mask.astype(f32)
    if slen_p != slen or bs_p != bs:
        data_p = jnp.pad(data_p, ((0, bs_p - bs), (0, slen_p - slen), (0, 0)))
        mask_p = jnp.pad(mask_p, ((0, bs_p - bs), (0, slen_p - slen)))
    data2 = data_p.reshape(rows_p, nfeat)
    mask2 = mask_p.reshape(rows_p, 1)

    out_dtype = compute_dtype
    w_item = np.dtype(compute_dtype).itemsize
    out_item = np.dtype(out_dtype).itemsize
    cost = pl.CostEstimate(
        flops=2 * rows_p * (3 * nfeat + NPAD) * NPAD,
        transcendentals=rows_p * NPAD,
        bytes_accessed=(rows_p * nfeat * 4 + rows_p * 4
                        + (3 * nfeat * NPAD + NPAD * NPAD) * w_item
                        + (2 * nfeat + NPAD) * 4
                        + rows_p * NPAD * out_item),
    )

    out = pl.pallas_call(
        functools.partial(_fx_kernel, slen_p=slen_p),
        out_shape=jax.ShapeDtypeStruct((rows_p, NPAD), out_dtype),
        grid_spec=pltpu.PrefetchScalarGridSpec(
            num_scalar_prefetch=0,
            grid=(rows_p // r_tile,),
            in_specs=[
                pl.BlockSpec((r_tile, nfeat), lambda r: (r, 0)),       # data rows (f32)
                pl.BlockSpec((r_tile, 1), lambda r: (r, 0)),           # padding mask
                pl.BlockSpec((1, nfeat), lambda r: (0, 0)),            # bn1 scale
                pl.BlockSpec((1, nfeat), lambda r: (0, 0)),            # bn1 shift
                pl.BlockSpec((3 * nfeat, NPAD), lambda r: (0, 0)),     # fused stem+conv+bn2scale
                pl.BlockSpec((1, NPAD), lambda r: (0, 0)),             # bn2 shift (padded)
                pl.BlockSpec((NPAD, NPAD), lambda r: (0, 0)),          # final_linear (padded)
            ],
            out_specs=pl.BlockSpec((r_tile, NPAD), lambda r: (r, 0)),
        ),
        compiler_params=pltpu.CompilerParams(
            dimension_semantics=("parallel",),
            vmem_limit_bytes=32 * 1024 * 1024),
        cost_estimate=cost,
    )(data2, mask2, s1, b1, A_cat, b2, W2t)

    out = out.reshape(bs_p, slen_p, NPAD)[:bs, :slen, :NLNC]
    return out.reshape(bs, slen, n_landmarks, N_COORDS)


def reference_forward(data, mask, p, n_landmarks):
    """Straightforward numpy mirror of the PyTorch forward (eval-mode BN)."""
    data = np.asarray(data, np.float64)
    mask = np.asarray(mask, np.float64)
    bs, slen, nfeat = data.shape
    L2 = n_landmarks // 2

    s1 = p["gamma1"] / np.sqrt(p["var1"] + BN_EPS)
    b1 = p["beta1"] - p["mean1"] * s1
    x = (data * s1 + b1) * mask[..., None]

    h = x @ p["W1"].T                                             # (bs, slen, L2*32)
    h = h.reshape(bs, slen, L2, 32).transpose(0, 3, 1, 2)         # (bs, 32, slen, L2)

    y = np.zeros((bs, N_COORDS, slen, n_landmarks), np.float64)
    wc = p["Wc"]
    for b in range(bs):
        for ho in range(slen):
            for wo in range(n_landmarks):
                for kh in range(3):
                    hi = ho + 1 - kh
                    if not (0 <= hi < slen):
                        continue
                    for kw in range(3):
                        num = wo + 1 - kw
                        if num % 2 != 0:
                            continue
                        wi = num // 2
                        if not (0 <= wi < L2):
                            continue
                        y[b, :, ho, wo] += h[b, :, hi, wi] @ wc[:, :, kh, kw]

    s2 = p["gamma2"] / np.sqrt(p["var2"] + BN_EPS)
    b2 = p["beta2"] - p["mean2"] * s2
    z = y * s2[None, :, None, None] + b2[None, :, None, None]
    z = z / (1.0 + np.exp(-z))                                    # SiLU
    z = z.transpose(0, 2, 3, 1).reshape(bs, slen, -1)
    out = z @ p["W2"].T
    return out.reshape(bs, slen, n_landmarks, N_COORDS)


if __name__ == "__main__":
    bs, slen, n_landmarks = 2, 16, 8
    nfeat = N_HIDDEN                      # out_dim == nfeat == N_HIDDEN
    L2 = n_landmarks // 2
    F = L2 * 32
    NLNC = n_landmarks * N_COORDS

    key = jax.random.PRNGKey(0)
    ks = jax.random.split(key, 16)
    data = jax.random.normal(ks[0], (bs, slen, nfeat), jnp.float32)
    mask = (jax.random.uniform(ks[1], (bs, slen)) < 0.75).astype(jnp.float32)

    params = {
        "W1": jax.random.normal(ks[2], (F, nfeat), jnp.float32) * 0.05,           # stem_linear1
        "Wc": jax.random.normal(ks[3], (32, N_COORDS, 3, 3), jnp.float32) * 0.1,  # conv_stem
        "W2": jax.random.normal(ks[4], (NLNC, NLNC), jnp.float32) * 0.1,          # final_linear
        "gamma1": 1.0 + 0.1 * jax.random.normal(ks[5], (nfeat,), jnp.float32),
        "beta1": 0.1 * jax.random.normal(ks[6], (nfeat,), jnp.float32),
        "mean1": 0.1 * jax.random.normal(ks[7], (nfeat,), jnp.float32),
        "var1": jax.random.uniform(ks[8], (nfeat,), jnp.float32, minval=0.5, maxval=1.5),
        "gamma2": 1.0 + 0.1 * jax.random.normal(ks[9], (N_COORDS,), jnp.float32),
        "beta2": 0.1 * jax.random.normal(ks[10], (N_COORDS,), jnp.float32),
        "mean2": 0.1 * jax.random.normal(ks[11], (N_COORDS,), jnp.float32),
        "var2": jax.random.uniform(ks[12], (N_COORDS,), jnp.float32, minval=0.5, maxval=1.5),
    }

    ref = reference_forward(np.asarray(data), np.asarray(mask),
                            {k: np.asarray(v, np.float64) for k, v in params.items()},
                            n_landmarks)

    # f32 compute path: tight check of the folded-weight algorithm
    out_f32 = jax.block_until_ready(
        feature_extractor_transposed(data, mask, params, n_landmarks,
                                     compute_dtype=jnp.float32))
    assert out_f32.shape == (bs, slen, n_landmarks, N_COORDS)
    np.testing.assert_allclose(np.asarray(out_f32, np.float64), ref, atol=2e-3, rtol=2e-3)

    # bf16 MXU path with bf16 writeback (default perf config)
    out_bf16 = jax.block_until_ready(
        feature_extractor_transposed(data, mask, params, n_landmarks,
                                     compute_dtype=jnp.bfloat16))
    out_bf16_f = np.asarray(out_bf16.astype(jnp.float32), np.float64)
    np.testing.assert_allclose(out_bf16_f, ref, atol=2e-2, rtol=2e-2)

    print("KERNEL_OK")
</pallas_src>

<mosaic_0001>
module attributes {stable_mosaic.version = 11 : i64} {
  func.func @_fx_kernel(%arg0: i32, %arg1: memref<16x128xf32, #tpu.memory_space<vmem>>, %arg2: memref<16x1xf32, #tpu.memory_space<vmem>>, %arg3: memref<1x128xf32, #tpu.memory_space<vmem>>, %arg4: memref<1x128xf32, #tpu.memory_space<vmem>>, %arg5: memref<384x128xf32, #tpu.memory_space<vmem>>, %arg6: memref<1x128xf32, #tpu.memory_space<vmem>>, %arg7: memref<128x128xf32, #tpu.memory_space<vmem>>, %arg8: memref<16x128xf32, #tpu.memory_space<vmem>>) attributes {dimension_semantics = [#tpu.dimension_semantics<parallel>], iteration_bounds = array<i64: 2>, scalar_prefetch = 0 : i64, scratch_operands = 0 : i64, tpu.core_type = #tpu.core_type<tc>, window_params = [{transform_indices = @transform_0, window_bounds = array<i64: 16, 128>}, {transform_indices = @transform_1, window_bounds = array<i64: 16, 1>}, {pipeline_mode = #tpu.pipeline_mode<synchronous>, transform_indices = @transform_2, window_bounds = array<i64: 1, 128>}, {pipeline_mode = #tpu.pipeline_mode<synchronous>, transform_indices = @transform_3, window_bounds = array<i64: 1, 128>}, {pipeline_mode = #tpu.pipeline_mode<synchronous>, transform_indices = @transform_4, window_bounds = array<i64: 384, 128>}, {pipeline_mode = #tpu.pipeline_mode<synchronous>, transform_indices = @transform_5, window_bounds = array<i64: 1, 128>}, {pipeline_mode = #tpu.pipeline_mode<synchronous>, transform_indices = @transform_6, window_bounds = array<i64: 128, 128>}, {transform_indices = @transform_7, window_bounds = array<i64: 16, 128>}]} {
    %c0 = arith.constant 0 : index
    %c0_0 = arith.constant 0 : index
    %0 = vector.load %arg1[%c0, %c0_0] : memref<16x128xf32, #tpu.memory_space<vmem>>, vector<16x128xf32>
    %c0_1 = arith.constant 0 : index
    %c0_2 = arith.constant 0 : index
    %1 = vector.load %arg3[%c0_1, %c0_2] : memref<1x128xf32, #tpu.memory_space<vmem>>, vector<1x128xf32>
    %2 = vector.broadcast %1 : vector<1x128xf32> to vector<16x128xf32>
    %3 = arith.mulf %0, %2 : vector<16x128xf32>
    %c0_3 = arith.constant 0 : index
    %c0_4 = arith.constant 0 : index
    %4 = vector.load %arg4[%c0_3, %c0_4] : memref<1x128xf32, #tpu.memory_space<vmem>>, vector<1x128xf32>
    %5 = vector.broadcast %4 : vector<1x128xf32> to vector<16x128xf32>
    %6 = arith.addf %3, %5 : vector<16x128xf32>
    %c0_5 = arith.constant 0 : index
    %c0_6 = arith.constant 0 : index
    %7 = vector.load %arg2[%c0_5, %c0_6] : memref<16x1xf32, #tpu.memory_space<vmem>>, vector<16x1xf32>
    %8 = vector.broadcast %7 : vector<16x1xf32> to vector<16x128xf32>
    %9 = arith.mulf %6, %8 : vector<16x128xf32>
    %10 = tpu.iota {dimensions = array<i32: 0>} : vector<16x1xi32>
    %c16_i32 = arith.constant 16 : i32
    %c0_i32 = arith.constant 0 : i32
    %11 = arith.cmpi eq, %c16_i32, %c0_i32 : i32
    %c1_i32 = arith.constant 1 : i32
    %12 = arith.select %11, %c1_i32, %c16_i32 : i32
    %13 = vector.broadcast %12 : i32 to vector<16x1xi32>
    %14 = arith.remsi %10, %13 : vector<16x1xi32>
    %c0_i32_7 = arith.constant 0 : i32
    %15 = vector.broadcast %c0_i32_7 : i32 to vector<16x1xi32>
    %16 = arith.cmpi ne, %14, %15 : vector<16x1xi32>
    %c0_i32_8 = arith.constant 0 : i32
    %17 = vector.broadcast %c0_i32_8 : i32 to vector<16x1xi32>
    %18 = arith.cmpi slt, %14, %17 : vector<16x1xi32>
    %c0_i32_9 = arith.constant 0 : i32
    %19 = arith.cmpi slt, %12, %c0_i32_9 : i32
    %20 = vector.broadcast %19 : i1 to vector<16x1xi1>
    %21 = vector.broadcast %20 : vector<16x1xi1> to vector<16x1xi1>
    %22 = arith.xori %18, %21 : vector<16x1xi1>
    %23 = arith.andi %22, %16 : vector<16x1xi1>
    %24 = vector.broadcast %12 : i32 to vector<16x1xi32>
    %25 = arith.addi %14, %24 : vector<16x1xi32>
    %26 = arith.select %23, %25, %14 : vector<16x1xi1>, vector<16x1xi32>
    %c15_i32 = arith.constant 15 : i32
    %27 = vector.broadcast %c15_i32 : i32 to vector<16x1xi32>
    %28 = arith.cmpi slt, %26, %27 : vector<16x1xi32>
    %29 = arith.extui %28 : vector<16x1xi1> to vector<16x1xi32>
    %30 = arith.sitofp %29 : vector<16x1xi32> to vector<16x1xf32>
    %c0_i32_10 = arith.constant 0 : i32
    %31 = vector.broadcast %c0_i32_10 : i32 to vector<16x1xi32>
    %32 = arith.cmpi sgt, %26, %31 : vector<16x1xi32>
    %33 = arith.extui %32 : vector<16x1xi1> to vector<16x1xi32>
    %34 = arith.sitofp %33 : vector<16x1xi32> to vector<16x1xf32>
    %c15_i32_11 = arith.constant 15 : i32
    %35 = tpu.dynamic_rotate %9 by %c15_i32_11 dim 0 : vector<16x128xf32>, i32 -> vector<16x128xf32>
    %36 = vector.broadcast %30 : vector<16x1xf32> to vector<16x128xf32>
    %37 = arith.mulf %35, %36 : vector<16x128xf32>
    %c1_i32_12 = arith.constant 1 : i32
    %38 = tpu.dynamic_rotate %9 by %c1_i32_12 dim 0 : vector<16x128xf32>, i32 -> vector<16x128xf32>
    %39 = vector.broadcast %34 : vector<16x1xf32> to vector<16x128xf32>
    %40 = arith.mulf %38, %39 : vector<16x128xf32>
    %c0_13 = arith.constant 0 : index
    %c0_14 = arith.constant 0 : index
    %41 = vector.load %arg5[%c0_13, %c0_14] : memref<384x128xf32, #tpu.memory_space<vmem>>, vector<128x128xf32>
    %cst = arith.constant dense<0.000000e+00> : vector<16x128xf32>
    %42 = tpu.matmul %37, %41, %cst {dimension_numbers = #tpu.dot_dimension_numbers<[1], [0], [0], [1], [0, 0, 1, 1], [], []>} : vector<16x128xf32>, vector<128x128xf32>, vector<16x128xf32> -> vector<16x128xf32>
    %c128 = arith.constant 128 : index
    %c0_15 = arith.constant 0 : index
    %43 = vector.load %arg5[%c128, %c0_15] : memref<384x128xf32, #tpu.memory_space<vmem>>, vector<128x128xf32>
    %cst_16 = arith.constant dense<0.000000e+00> : vector<16x128xf32>
    %44 = tpu.matmul %9, %43, %cst_16 {dimension_numbers = #tpu.dot_dimension_numbers<[1], [0], [0], [1], [0, 0, 1, 1], [], []>} : vector<16x128xf32>, vector<128x128xf32>, vector<16x128xf32> -> vector<16x128xf32>
    %45 = arith.addf %42, %44 : vector<16x128xf32>
    %c256 = arith.constant 256 : index
    %c0_17 = arith.constant 0 : index
    %46 = vector.load %arg5[%c256, %c0_17] : memref<384x128xf32, #tpu.memory_space<vmem>>, vector<128x128xf32>
    %cst_18 = arith.constant dense<0.000000e+00> : vector<16x128xf32>
    %47 = tpu.matmul %40, %46, %cst_18 {dimension_numbers = #tpu.dot_dimension_numbers<[1], [0], [0], [1], [0, 0, 1, 1], [], []>} : vector<16x128xf32>, vector<128x128xf32>, vector<16x128xf32> -> vector<16x128xf32>
    %48 = arith.addf %45, %47 : vector<16x128xf32>
    %c0_19 = arith.constant 0 : index
    %c0_20 = arith.constant 0 : index
    %49 = vector.load %arg6[%c0_19, %c0_20] : memref<1x128xf32, #tpu.memory_space<vmem>>, vector<1x128xf32>
    %50 = vector.broadcast %49 : vector<1x128xf32> to vector<16x128xf32>
    %51 = arith.addf %48, %50 : vector<16x128xf32>
    %52 = arith.negf %51 : vector<16x128xf32>
    %53 = math.exp %52 : vector<16x128xf32>
    %cst_21 = arith.constant 1.000000e+00 : f32
    %54 = vector.broadcast %cst_21 : f32 to vector<16x128xf32>
    %55 = arith.addf %54, %53 : vector<16x128xf32>
    %56 = arith.divf %54, %55 : vector<16x128xf32>
    %57 = arith.mulf %51, %56 : vector<16x128xf32>
    %c0_22 = arith.constant 0 : index
    %c0_23 = arith.constant 0 : index
    %58 = vector.load %arg7[%c0_22, %c0_23] : memref<128x128xf32, #tpu.memory_space<vmem>>, vector<128x128xf32>
    %cst_24 = arith.constant dense<0.000000e+00> : vector<16x128xf32>
    %59 = tpu.matmul %57, %58, %cst_24 {dimension_numbers = #tpu.dot_dimension_numbers<[1], [0], [0], [1], [0, 0, 1, 1], [], []>} : vector<16x128xf32>, vector<128x128xf32>, vector<16x128xf32> -> vector<16x128xf32>
    %c0_25 = arith.constant 0 : index
    %c0_26 = arith.constant 0 : index
    %60 = vector.load %arg8[%c0_25, %c0_26] : memref<16x128xf32, #tpu.memory_space<vmem>>, vector<16x128xf32>
    tpu.vector_store %arg8[%c0_25, %c0_26], %59 {strides = array<i32>} : memref<16x128xf32, #tpu.memory_space<vmem>>, vector<16x128xf32>,
    return
  }
  func.func @transform_0(%arg0: i32) -> (i32, i32) {
    %c0_i32 = arith.constant 0 : i32
    %c0_i32_0 = arith.constant 0 : i32
    return %arg0, %c0_i32 : i32, i32
  }
  func.func @transform_1(%arg0: i32) -> (i32, i32) {
    %c0_i32 = arith.constant 0 : i32
    %c0_i32_0 = arith.constant 0 : i32
    return %arg0, %c0_i32 : i32, i32
  }
  func.func @transform_2(%arg0: i32) -> (i32, i32) {
    %c0_i32 = arith.constant 0 : i32
    %c0_i32_0 = arith.constant 0 : i32
    %c0_i32_1 = arith.constant 0 : i32
    return %c0_i32, %c0_i32_0 : i32, i32
  }
  func.func @transform_3(%arg0: i32) -> (i32, i32) {
    %c0_i32 = arith.constant 0 : i32
    %c0_i32_0 = arith.constant 0 : i32
    %c0_i32_1 = arith.constant 0 : i32
    return %c0_i32, %c0_i32_0 : i32, i32
  }
  func.func @transform_4(%arg0: i32) -> (i32, i32) {
    %c0_i32 = arith.constant 0 : i32
    %c0_i32_0 = arith.constant 0 : i32
    %c0_i32_1 = arith.constant 0 : i32
    return %c0_i32, %c0_i32_0 : i32, i32
  }
  func.func @transform_5(%arg0: i32) -> (i32, i32) {
    %c0_i32 = arith.constant 0 : i32
    %c0_i32_0 = arith.constant 0 : i32
    %c0_i32_1 = arith.constant 0 : i32
    return %c0_i32, %c0_i32_0 : i32, i32
  }
  func.func @transform_6(%arg0: i32) -> (i32, i32) {
    %c0_i32 = arith.constant 0 : i32
    %c0_i32_0 = arith.constant 0 : i32
    %c0_i32_1 = arith.constant 0 : i32
    return %c0_i32, %c0_i32_0 : i32, i32
  }
  func.func @transform_7(%arg0: i32) -> (i32, i32) {
    %c0_i32 = arith.constant 0 : i32
    %c0_i32_0 = arith.constant 0 : i32
    return %arg0, %c0_i32 : i32, i32
  }
}

</mosaic_0001>

<llo_original>
// kernel: tpu_custom_call.1
$region0: #{tpu_custom_call.1}
  #allocation0 [shape = 'u32[]', space=smem, size = 0x4, offset = 0x4, fixed_abs, tag = 'smem constant byte address 0x4 - core index']
  #allocation1 [shape = 'u32[144,128]{1,0:T(1,128)}', space=vmem, size = 0x12000, scoped, tag = 'internal scratch']
  %s0 = inlined_call_operand.vmem [shape: f32[32,128], index: 0, kind: input, shape index: {}]
  %s1 = inlined_call_operand.vmem [shape: f32[32,1], index: 1, kind: input, shape index: {}]
  %s2 = inlined_call_operand.vmem [shape: f32[1,128], index: 2, kind: input, shape index: {}]
  %s3 = inlined_call_operand.vmem [shape: f32[1,128], index: 3, kind: input, shape index: {}]
  %s4 = inlined_call_operand.hbm [shape: f32[384,128], index: 4, kind: input, shape index: {}]
  %s5 = inlined_call_operand.vmem [shape: f32[1,128], index: 5, kind: input, shape index: {}]
  %s6 = inlined_call_operand.hbm [shape: f32[128,128], index: 6, kind: input, shape index: {}]
  %s7 = inlined_call_operand.hbm [shape: f32[32,128], index: 7, kind: output, shape index: {}]
  %s8 = sld [smem:[#allocation0]]
  $region69: #{tpu_custom_call.1} parent=0
    _
  %s10 = ssub.s32 1, %s8
  %s11 = scalar_select 0, %s10, %s8
  $region1: #{tpu_custom_call.1} parent=0
    #allocation2 [shape = 'u8[196608]{0}', space=vmem, size = 0x30000, scoped, tag = 'input window, operand 4, single buffered']
    #allocation3 [shape = 's32[2]{0}', space=sflag, size = 0x8, scoped, tag = 'scoped memory for tpu_custom_call.1']
    #allocation4 [shape = 's32[2]{0}', space=sflag, size = 0x8, scoped, tag = 'scoped memory for tpu_custom_call.1']
    #allocation5 [shape = 'u8[65536]{0}', space=vmem, size = 0x10000, scoped, tag = 'input window, operand 6, single buffered']
    #allocation6 [shape = 's32[1]{0}', space=sflag, size = 0x4, scoped, tag = 'scoped memory for tpu_custom_call.1']
    #allocation7 [shape = 'u8[16384]{0}', space=vmem, size = 0x4000, scoped, tag = 'output window, operand 0']
    %12 = vsyncpa [#allocation3], 0
    %13 = vsyncpa [#allocation6], 0
    %14 = vsyncpa [#allocation4], 0
    %s15 = scalar_lea.sflag [#allocation4], 1
    %16 = vsyncpa %s15, 0
    loop: start=0, step=1, limit=4
    $region2: #{tpu_custom_call.1} parent=1 // loop_pre_header
      _
    $region3: #{tpu_custom_call.1} parent=1 // loop_header
      %s18 = sphi 0, %s22
      %p19 = scmp.ge.s32.totalorder %s18, 4
      %s28 = sphi 0, %s30
      %s31 = sphi 0, %s28
      %s32 = sphi 0, %s31
      %s48 = sphi 0, %s32
      %s54 = sphi 0, %s56
      %s57 = sphi 0, %s54
      %s58 = sphi 0, %s57
      %s74 = sphi 0, %s58
      %s78 = sphi 0, %s78
      %s80 = sphi 0, %s78
      %s81 = sphi 0, %s80
      %s95 = sphi 0, %s81
      %s99 = sphi 0, %s99
      %s101 = sphi 0, %s99
      %s102 = sphi 0, %s101
      %s116 = sphi 0, %s102
      %s120 = sphi 0, %s120
      %s122 = sphi 0, %s120
      %s123 = sphi 0, %s122
      %s137 = sphi 0, %s123
      %s141 = sphi 0, %s141
      %s143 = sphi 0, %s141
      %s144 = sphi 0, %s143
      %s158 = sphi 0, %s144
      %s162 = sphi 0, %s162
      %s164 = sphi 0, %s162
      %s165 = sphi 0, %s164
      %s179 = sphi 0, %s165
      %s185 = sphi 0, %s187
      %s188 = sphi 0, %s185
      %s189 = sphi 0, %s188
      %s205 = sphi 0, %s189
    $region4: #{tpu_custom_call.1} parent=1 // loop_header_branch
      %21 = sbr.rel (%p19) target = $region8
    $region5: #{tpu_custom_call.1} parent=1 // loop_body
      %s23 = ssub.s32 %s18, 1
      %s24 = ssub.s32 %s18, 2
      %s25 = sadd.s32 %s18, 1
      %s26 = ssub.s32 %s18, %s25
      %p27 = scmp.eq.s32.totalorder %s26, 0
      %s29 = sadd.s32 %s28, 1
      %s30 = scalar_select %p27, %s28, %s29
      %p33 = pneg %p27
      %p34 = scmp.eq.s32.totalorder %s18, 1
      %p35 = por %p33, %p34
      %p36 = scmp.ne.s32.totalorder %s28, %s31
      %p37 = scmp.eq.s32.totalorder %s18, 0
      %p38 = por %p36, %p37
      %p39 = scmp.ne.s32.totalorder %s28, %s31
      %p40 = scmp.eq.s32.totalorder %s23, 1
      %p41 = por %p39, %p40
      %p42 = scmp.ne.s32.totalorder %s31, %s32
      %p43 = scmp.eq.s32.totalorder %s23, 0
      %p44 = por %p42, %p43
      %p45 = scmp.ne.s32.totalorder %s31, %s32
      %p46 = scmp.eq.s32.totalorder %s24, 1
      %p47 = por %p45, %p46
      %p49 = scmp.ne.s32.totalorder %s32, %s48
      %p50 = scmp.eq.s32.totalorder %s24, 0
      %p51 = por %p49, %p50
      %s52 = ssub.s32 %s18, %s25
      %p53 = scmp.eq.s32.totalorder %s52, 0
      %s55 = sadd.s32 %s54, 1
      %s56 = scalar_select %p53, %s54, %s55
      %p59 = pneg %p53
      %p60 = scmp.eq.s32.totalorder %s18, 1
      %p61 = por %p59, %p60
      %p62 = scmp.ne.s32.totalorder %s54, %s57
      %p63 = scmp.eq.s32.totalorder %s18, 0
      %p64 = por %p62, %p63
      %p65 = scmp.ne.s32.totalorder %s54, %s57
      %p66 = scmp.eq.s32.totalorder %s23, 1
      %p67 = por %p65, %p66
      %p68 = scmp.ne.s32.totalorder %s57, %s58
      %p69 = scmp.eq.s32.totalorder %s23, 0
      %p70 = por %p68, %p69
      %p71 = scmp.ne.s32.totalorder %s57, %s58
      %p72 = scmp.eq.s32.totalorder %s24, 1
      %p73 = por %p71, %p72
      %p75 = scmp.ne.s32.totalorder %s58, %s74
      %p76 = scmp.eq.s32.totalorder %s24, 0
      %p77 = por %p75, %p76
      %s79 = sadd.s32 %s78, 1
      %p82 = scmp.eq.s32.totalorder %s18, 1
      %p83 = scmp.ne.s32.totalorder %s78, %s80
      %p84 = scmp.eq.s32.totalorder %s18, 0
      %p85 = por %p83, %p84
      %p86 = scmp.ne.s32.totalorder %s78, %s80
      %p87 = scmp.eq.s32.totalorder %s23, 1
      %p88 = por %p86, %p87
      %p89 = scmp.ne.s32.totalorder %s80, %s81
      %p90 = scmp.eq.s32.totalorder %s23, 0
      %p91 = por %p89, %p90
      %p92 = scmp.ne.s32.totalorder %s80, %s81
      %p93 = scmp.eq.s32.totalorder %s24, 1
      %p94 = por %p92, %p93
      %p96 = scmp.ne.s32.totalorder %s81, %s95
      %p97 = scmp.eq.s32.totalorder %s24, 0
      %p98 = por %p96, %p97
      %s100 = sadd.s32 %s99, 1
      %p103 = scmp.eq.s32.totalorder %s18, 1
      %p104 = scmp.ne.s32.totalorder %s99, %s101
      %p105 = scmp.eq.s32.totalorder %s18, 0
      %p106 = por %p104, %p105
      %p107 = scmp.ne.s32.totalorder %s99, %s101
      %p108 = scmp.eq.s32.totalorder %s23, 1
      %p109 = por %p107, %p108
      %p110 = scmp.ne.s32.totalorder %s101, %s102
      %p111 = scmp.eq.s32.totalorder %s23, 0
      %p112 = por %p110, %p111
      %p113 = scmp.ne.s32.totalorder %s101, %s102
      %p114 = scmp.eq.s32.totalorder %s24, 1
      %p115 = por %p113, %p114
      %p117 = scmp.ne.s32.totalorder %s102, %s116
      %p118 = scmp.eq.s32.totalorder %s24, 0
      %p119 = por %p117, %p118
      %s121 = sadd.s32 %s120, 1
      %p124 = scmp.eq.s32.totalorder %s18, 1
      %p125 = scmp.ne.s32.totalorder %s120, %s122
      %p126 = scmp.eq.s32.totalorder %s18, 0
      %p127 = por %p125, %p126
      %p128 = scmp.ne.s32.totalorder %s120, %s122
      %p129 = scmp.eq.s32.totalorder %s23, 1
      %p130 = por %p128, %p129
      %p131 = scmp.ne.s32.totalorder %s122, %s123
      %p132 = scmp.eq.s32.totalorder %s23, 0
      %p133 = por %p131, %p132
      %p134 = scmp.ne.s32.totalorder %s122, %s123
      %p135 = scmp.eq.s32.totalorder %s24, 1
      %p136 = por %p134, %p135
      %p138 = scmp.ne.s32.totalorder %s123, %s137
      %p139 = scmp.eq.s32.totalorder %s24, 0
      %p140 = por %p138, %p139
      %s142 = sadd.s32 %s141, 1
      %p145 = scmp.eq.s32.totalorder %s18, 1
      %p146 = scmp.ne.s32.totalorder %s141, %s143
      %p147 = scmp.eq.s32.totalorder %s18, 0
      %p148 = por %p146, %p147
      %p149 = scmp.ne.s32.totalorder %s141, %s143
      %p150 = scmp.eq.s32.totalorder %s23, 1
      %p151 = por %p149, %p150
      %p152 = scmp.ne.s32.totalorder %s143, %s144
      %p153 = scmp.eq.s32.totalorder %s23, 0
      %p154 = por %p152, %p153
      %p155 = scmp.ne.s32.totalorder %s143, %s144
      %p156 = scmp.eq.s32.totalorder %s24, 1
      %p157 = por %p155, %p156
      %p159 = scmp.ne.s32.totalorder %s144, %s158
      %p160 = scmp.eq.s32.totalorder %s24, 0
      %p161 = por %p159, %p160
      %s163 = sadd.s32 %s162, 1
      %p166 = scmp.eq.s32.totalorder %s18, 1
      %p167 = scmp.ne.s32.totalorder %s162, %s164
      %p168 = scmp.eq.s32.totalorder %s18, 0
      %p169 = por %p167, %p168
      %p170 = scmp.ne.s32.totalorder %s162, %s164
      %p171 = scmp.eq.s32.totalorder %s23, 1
      %p172 = por %p170, %p171
      %p173 = scmp.ne.s32.totalorder %s164, %s165
      %p174 = scmp.eq.s32.totalorder %s23, 0
      %p175 = por %p173, %p174
      %p176 = scmp.ne.s32.totalorder %s164, %s165
      %p177 = scmp.eq.s32.totalorder %s24, 1
      %p178 = por %p176, %p177
      %p180 = scmp.ne.s32.totalorder %s165, %s179
      %p181 = scmp.eq.s32.totalorder %s24, 0
      %p182 = por %p180, %p181
      %s183 = ssub.s32 %s18, %s25
      %p184 = scmp.eq.s32.totalorder %s183, 0
      %s186 = sadd.s32 %s185, 1
      %s187 = scalar_select %p184, %s185, %s186
      %p190 = pneg %p184
      %p191 = scmp.eq.s32.totalorder %s18, 1
      %p192 = por %p190, %p191
      %p193 = scmp.ne.s32.totalorder %s185, %s188
      %p194 = scmp.eq.s32.totalorder %s18, 0
      %p195 = por %p193, %p194
      %p196 = scmp.ne.s32.totalorder %s185, %s188
      %p197 = scmp.eq.s32.totalorder %s23, 1
      %p198 = por %p196, %p197
      %p199 = scmp.ne.s32.totalorder %s188, %s189
      %p200 = scmp.eq.s32.totalorder %s23, 0
      %p201 = por %p199, %p200
      %p202 = scmp.ne.s32.totalorder %s188, %s189
      %p203 = scmp.eq.s32.totalorder %s24, 1
      %p204 = por %p202, %p203
      %p206 = scmp.ne.s32.totalorder %s189, %s205
      %p207 = scmp.eq.s32.totalorder %s24, 0
      %p208 = por %p206, %p207
      %p209 = scmp.le.s32.totalorder 1, %s18
      %p210 = scmp.lt.s32.totalorder %s18, 3
      %p211 = pnand %p209, %p210
      %p212 = pneg %p211
      // Predicated region
      $region9: #{tpu_custom_call.1} parent=5 // pred_check
        _
      $region10: #{tpu_custom_call.1} parent=5 // pred_check_branch
        %214 = sbr.rel (%p211) target = $region12
      $region11: #{tpu_custom_call.1} parent=5 // pred_region
        %s215 = ssub.s32 %s18, 1
        // Predicated region
        $region13: #{tpu_custom_call.1} parent=11 // pred_check
          %p216 = pneg %p91
        $region14: #{tpu_custom_call.1} parent=11 // pred_check_branch
          %218 = sbr.rel (%p216) target = $region16
        $region15: #{tpu_custom_call.1} parent=11 // pred_region
          _
        $region16: #{tpu_custom_call.1} parent=11 // pred_fallthru
          _
        // Predicated region
        $region17: #{tpu_custom_call.1} parent=11 // pred_check
          %p219 = pneg %p112
        $region18: #{tpu_custom_call.1} parent=11 // pred_check_branch
          %221 = sbr.rel (%p219) target = $region20
        $region19: #{tpu_custom_call.1} parent=11 // pred_region
          _
        $region20: #{tpu_custom_call.1} parent=11 // pred_fallthru
          _
        // Predicated region
        $region21: #{tpu_custom_call.1} parent=11 // pred_check
          %p222 = pneg %p133
        $region22: #{tpu_custom_call.1} parent=11 // pred_check_branch
          %224 = sbr.rel (%p222) target = $region24
        $region23: #{tpu_custom_call.1} parent=11 // pred_region
          %s226 = ssub.s32 6144, 6144
          %227 = vsyncadd [#allocation3], %s226
          %s228 = sshll.u32 [#allocation2], 4
          %s229 = int_to_ptr.vmem [resolvable:$true] %s228
          %234 = dma.hbm_to_vmem [thread:$0]  %s4, 6144, %s229, [#allocation3], 128, 128, 8
        $region24: #{tpu_custom_call.1} parent=11 // pred_fallthru
          _
        // Predicated region
        $region25: #{tpu_custom_call.1} parent=11 // pred_check
          %p235 = pneg %p154
        $region26: #{tpu_custom_call.1} parent=11 // pred_check_branch
          %237 = sbr.rel (%p235) target = $region28
        $region27: #{tpu_custom_call.1} parent=11 // pred_region
          _
        $region28: #{tpu_custom_call.1} parent=11 // pred_fallthru
          _
        // Predicated region
        $region29: #{tpu_custom_call.1} parent=11 // pred_check
          %p238 = pneg %p175
        $region30: #{tpu_custom_call.1} parent=11 // pred_check_branch
          %240 = sbr.rel (%p238) target = $region32
        $region31: #{tpu_custom_call.1} parent=11 // pred_region
          %s242 = ssub.s32 2048, 2048
          %243 = vsyncadd [#allocation6], %s242
          %s244 = sshll.u32 [#allocation5], 4
          %s245 = int_to_ptr.vmem [resolvable:$true] %s244
          %250 = dma.hbm_to_vmem [thread:$0]  %s6, 2048, %s245, [#allocation6], 128, 128, 8
        $region32: #{tpu_custom_call.1} parent=11 // pred_fallthru
          _
      $region12: #{tpu_custom_call.1} parent=5 // pred_fallthru
        _
      %p251 = scmp.lt.s32.totalorder %s18, 2
      // Predicated region
      $region33: #{tpu_custom_call.1} parent=5 // pred_check
        %p252 = pneg %p251
      $region34: #{tpu_custom_call.1} parent=5 // pred_check_branch
        %254 = sbr.rel (%p252) target = $region36
      $region35: #{tpu_custom_call.1} parent=5 // pred_region
        // Predicated region
        $region37: #{tpu_custom_call.1} parent=35 // pred_check
          %p255 = pneg %p38
        $region38: #{tpu_custom_call.1} parent=35 // pred_check_branch
          %257 = sbr.rel (%p255) target = $region40
        $region39: #{tpu_custom_call.1} parent=35 // pred_region
          %s258 = smul.u32 2, %s18
          %p259 = scmp.lt.s32.totalorder %s258, 3
          %s260 = scalar_select %p259, %s258, 3
          %s261 = smul.addr %s260, 8
          %s262 = scalar_lea.vmem %s0, %s261
          %s263 = smul.u32 2, %s18
        $region40: #{tpu_custom_call.1} parent=35 // pred_fallthru
          _
        // Predicated region
        $region41: #{tpu_custom_call.1} parent=35 // pred_check
          %p264 = pneg %p64
        $region42: #{tpu_custom_call.1} parent=35 // pred_check_branch
          %266 = sbr.rel (%p264) target = $region44
        $region43: #{tpu_custom_call.1} parent=35 // pred_region
          %s267 = smul.u32 2, %s18
          %p268 = scmp.lt.s32.totalorder %s267, 3
          %s269 = scalar_select %p268, %s267, 3
          %s270 = smul.addr %s269, 8
          %s271 = scalar_lea.vmem %s1, %s270
          %s272 = smul.u32 2, %s18
        $region44: #{tpu_custom_call.1} parent=35 // pred_fallthru
          _
      $region36: #{tpu_custom_call.1} parent=5 // pred_fallthru
        _
      %p273 = scmp.le.s32.totalorder 1, %s18
      %p274 = scmp.lt.s32.totalorder %s18, 3
      %p275 = pnand %p273, %p274
      %p276 = pneg %p275
      // Predicated region
      $region45: #{tpu_custom_call.1} parent=5 // pred_check
        _
      $region46: #{tpu_custom_call.1} parent=5 // pred_check_branch
        %278 = sbr.rel (%p275) target = $region48
      $region47: #{tpu_custom_call.1} parent=5 // pred_region
        %s279 = ssub.s32 %s18, 1
        // Predicated region
        $region49: #{tpu_custom_call.1} parent=47 // pred_check
          %p280 = pneg %p133
        $region50: #{tpu_custom_call.1} parent=47 // pred_check_branch
          %282 = sbr.rel (%p280) target = $region52
        $region51: #{tpu_custom_call.1} parent=47 // pred_region
          %283 = dma.done [#allocation3], 6144
        $region52: #{tpu_custom_call.1} parent=47 // pred_fallthru
          _
        // Predicated region
        $region53: #{tpu_custom_call.1} parent=47 // pred_check
          %p284 = pneg %p175
        $region54: #{tpu_custom_call.1} parent=47 // pred_check_branch
          %286 = sbr.rel (%p284) target = $region56
        $region55: #{tpu_custom_call.1} parent=47 // pred_region
          %287 = dma.done [#allocation6], 2048
        $region56: #{tpu_custom_call.1} parent=47 // pred_fallthru
          _
        %s288 = smul.u32 2, %s23
        %p289 = scmp.lt.s32.totalorder %s288, 3
        %s290 = scalar_select %p289, %s288, 3
        %s291 = smul.addr %s290, 8
        %s292 = scalar_lea.vmem %s0, %s291
        %p293 = pneg %p44
        %p294 = pneg %p41
        %s295 = smul.u32 2, %s23
        %p296 = scmp.lt.s32.totalorder %s295, 3
        %s297 = scalar_select %p296, %s295, 3
        %s298 = smul.addr %s297, 8
        %s299 = scalar_lea.vmem %s1, %s298
        %p300 = pneg %p70
        %p301 = pneg %p67
        %p302 = pneg %p91
        %p303 = pneg %p88
        %p304 = pneg %p112
        %p305 = pneg %p109
        %p306 = pneg %p133
        %p307 = pneg %p130
        %p308 = pneg %p154
        %p309 = pneg %p151
        %p310 = pneg %p175
        %p311 = pneg %p172
        %p312 = pneg %p201
        %p313 = pneg %p198
        %s314 = sand.u32 %s188, 1
        %s315 = scalar_lea.sflag [#allocation4], %s314
        %s316 = sand.u32 %s188, 1
        %s317 = smul.addr %s316, 16
        %s318 = scalar_lea.vmem [#allocation7], %s317
        %s319 = smul.u32 2, %s23
        %p320 = scmp.lt.s32.totalorder %s319, 3
        %s321 = scalar_select %p320, %s319, 3
        %s322 = smul.addr %s321, 8
        %s323 = scalar_lea.vmem %s0, %s322
        %s324 = smul.u32 2, %s23
        %s325 = smul.u32 2, %s23
        %p326 = scmp.lt.s32.totalorder %s325, 3
        %s327 = scalar_select %p326, %s325, 3
        %s328 = smul.addr %s327, 8
        %s329 = scalar_lea.vmem %s1, %s328
        %s330 = smul.u32 2, %s23
        %s331 = smul.u32 2, %s23
        %v332 = vld [vmem:[%s323] sm:$0xff]
        %v333 = vld [vmem:[%s323 + $0x8] sm:$0xff]
        %v334 = vld [vmem:[%s2] sm:$0x1]
        %v336 = vlaneseq
        %v337 = vshrl.u32 %v336, 7
        %v338 = vsub.s32 0, %v337
        %v339 = vrot.slane %v334, %v338
        %v341 = vmul.f32 %v332, %v339
        %v342 = vmul.f32 %v333, %v339
        %v343 = vld [vmem:[%s3] sm:$0x1]
        %v345 = vlaneseq
        %v346 = vshrl.u32 %v345, 7
        %v347 = vsub.s32 0, %v346
        %v348 = vrot.slane %v343, %v347
        %v350 = vadd.f32 %v341, %v348
        %v351 = vadd.f32 %v342, %v348
        %v352 = vld [vmem:[%s329] sm:$0xff]
        %v353 = vld [vmem:[%s329 + $0x8] sm:$0xff]
        %355 = vset.pattern.permute.xlu0 0
        %356 = vperm.xlu0 %355, %v352
        %v357 = vpop.permute.xlu0 %356
        %360 = vset.pattern.permute.xlu0 0
        %361 = vperm.xlu0 %360, %v353
        %v362 = vpop.permute.xlu0 %361
        %v364 = vmul.f32 %v350, %v357
        %v365 = vmul.f32 %v351, %v362
        %v366 = vlaneseq
        %v367 = vshrl.u32 %v366, 7
        %v368 = vadd.s32 %v367, 8
        %vm369 = vcmp.lt.s32.totalorder %v367, 0
        %v370 = vsub.s32 0, %v367
        %v371 = vsel %vm369, %v370, %v367
        %v372 = vshrl.u32 %v371, 4
        %v373 = vand.u32 %v371, 15
        %v374 = vsub.s32 0, %v373
        %v375 = vsel %vm369, %v374, %v373
        %vm376 = vcmp.lt.s32.totalorder %v368, 0
        %v377 = vsub.s32 0, %v368
        %v378 = vsel %vm376, %v377, %v368
        %v379 = vshrl.u32 %v378, 4
        %v380 = vand.u32 %v378, 15
        %v381 = vsub.s32 0, %v380
        %v382 = vsel %vm376, %v381, %v380
        %vm383 = vcmp.ne.s32.totalorder %v375, 0
        %vm384 = vcmp.ne.s32.totalorder %v382, 0
        %vm385 = vcmp.lt.s32.totalorder %v375, 0
        %vm386 = vcmp.lt.s32.totalorder %v382, 0
        %vm387 = vmand %vm385, %vm383
        %vm388 = vmand %vm386, %vm384
        %v389 = vadd.s32 %v375, 16
        %v390 = vadd.s32 %v382, 16
        %v391 = vsel %vm387, %v389, %v375
        %v392 = vsel %vm388, %v390, %v382
        %vm393 = vcmp.lt.s32.totalorder %v391, 15
        %vm394 = vcmp.lt.s32.totalorder %v392, 15
        %v395 = vsel %vm393, 1, 0
        %v396 = vsel %vm394, 1, 0
        %v397 = vcvt.s32.f32 %v395
        %v398 = vcvt.s32.f32 %v396
        %vm399 = vcmp.gt.s32.totalorder %v391, 0
        %vm400 = vcmp.gt.s32.totalorder %v392, 0
        %v401 = vsel %vm399, 1, 0
        %v402 = vsel %vm400, 1, 0
        %v403 = vcvt.s32.f32 %v401
        %v404 = vcvt.s32.f32 %v402
        %v405 = vrot.slane %v364, 1
        %v406 = vrot.slane %v365, 1
        %vm407 = vcmp.lt.s32.totalorder %v367, 7
        %v408 = vsel %vm407, %v405, %v406
        %v409 = vsel %vm407, %v406, %v405
        %v410 = vmul.f32 %v408, %v397
        %v411 = vmul.f32 %v409, %v398
        %v412 = vrot.slane %v364, 7
        %v413 = vrot.slane %v365, 7
        %vm414 = vcmp.lt.s32.totalorder %v367, 1
        %v415 = vsel %vm414, %v412, %v413
        %v416 = vsel %vm414, %v413, %v412
        %v417 = vmul.f32 %v416, %v403
        %v418 = vmul.f32 %v415, %v404
        %v419 = vld [vmem:[#allocation2] sm:$0xff]
        %v420 = vld [vmem:[#allocation2 + $0x8] sm:$0xff]
        %v421 = vld [vmem:[#allocation2 + $0x10] sm:$0xff]
        %v422 = vld [vmem:[#allocation2 + $0x18] sm:$0xff]
        %v423 = vld [vmem:[#allocation2 + $0x20] sm:$0xff]
        %v424 = vld [vmem:[#allocation2 + $0x28] sm:$0xff]
        %v425 = vld [vmem:[#allocation2 + $0x30] sm:$0xff]
        %v426 = vld [vmem:[#allocation2 + $0x38] sm:$0xff]
        %v427 = vld [vmem:[#allocation2 + $0x40] sm:$0xff]
        %v428 = vld [vmem:[#allocation2 + $0x48] sm:$0xff]
        %v429 = vld [vmem:[#allocation2 + $0x50] sm:$0xff]
        %v430 = vld [vmem:[#allocation2 + $0x58] sm:$0xff]
        %v431 = vld [vmem:[#allocation2 + $0x60] sm:$0xff]
        %v432 = vld [vmem:[#allocation2 + $0x68] sm:$0xff]
        %v433 = vld [vmem:[#allocation2 + $0x70] sm:$0xff]
        %v434 = vld [vmem:[#allocation2 + $0x78] sm:$0xff]
        %v435 = vld [vmem:[#allocation2 + $0x80] sm:$0xff]
        %v436 = vld [vmem:[#allocation2 + $0x88] sm:$0xff]
        %v437 = vld [vmem:[#allocation2 + $0x90] sm:$0xff]
        %v438 = vld [vmem:[#allocation2 + $0x98] sm:$0xff]
        %v439 = vld [vmem:[#allocation2 + $0xa0] sm:$0xff]
        %v440 = vld [vmem:[#allocation2 + $0xa8] sm:$0xff]
        %v441 = vld [vmem:[#allocation2 + $0xb0] sm:$0xff]
        %v442 = vld [vmem:[#allocation2 + $0xb8] sm:$0xff]
        %v443 = vld [vmem:[#allocation2 + $0xc0] sm:$0xff]
        %v444 = vld [vmem:[#allocation2 + $0xc8] sm:$0xff]
        %v445 = vld [vmem:[#allocation2 + $0xd0] sm:$0xff]
        %v446 = vld [vmem:[#allocation2 + $0xd8] sm:$0xff]
        %v447 = vld [vmem:[#allocation2 + $0xe0] sm:$0xff]
        %v448 = vld [vmem:[#allocation2 + $0xe8] sm:$0xff]
        %v449 = vld [vmem:[#allocation2 + $0xf0] sm:$0xff]
        %v450 = vld [vmem:[#allocation2 + $0xf8] sm:$0xff]
        %451 = vmatprep.subr.mxu0 0.0
        %452 = vmatpush1.msra.mxu0 %v435
        %453 = vmatprep.subr.mxu0 0.0
        %454 = vmatpush1.msra.mxu0 %v436
        %455 = vmatprep.subr.mxu0 0.0
        %456 = vmatpush1.msra.mxu0 %v437
        %457 = vmatprep.subr.mxu0 0.0
        %458 = vmatpush1.msra.mxu0 %v438
        %459 = vmatprep.subr.mxu0 0.0
        %460 = vmatpush1.msra.mxu0 %v439
        %461 = vmatprep.subr.mxu0 0.0
        %462 = vmatpush1.msra.mxu0 %v440
        %463 = vmatprep.subr.mxu0 0.0
        %464 = vmatpush1.msra.mxu0 %v441
        %465 = vmatprep.subr.mxu0 0.0
        %466 = vmatpush1.msra.mxu0 %v442
        %467 = vmatprep.subr.mxu0 0.0
        %468 = vmatpush1.msra.mxu0 %v443
        %469 = vmatprep.subr.mxu0 0.0
        %470 = vmatpush1.msra.mxu0 %v444
        %471 = vmatprep.subr.mxu0 0.0
        %472 = vmatpush1.msra.mxu0 %v445
        %473 = vmatprep.subr.mxu0 0.0
        %474 = vmatpush1.msra.mxu0 %v446
        %475 = vmatprep.subr.mxu0 0.0
        %476 = vmatpush1.msra.mxu0 %v447
        %477 = vmatprep.subr.mxu0 0.0
        %478 = vmatpush1.msra.mxu0 %v448
        %479 = vmatprep.subr.mxu0 0.0
        %480 = vmatpush1.msra.mxu0 %v449
        %481 = vmatprep.subr.mxu0 0.0
        %482 = vmatpush1.msra.mxu0 %v450
        %483 = vmatprep.subr.mxu0 0.0
        %484 = vmatpush1.msra.mxu0 0.0
        %485 = vmatprep.subr.mxu0 0.0
        %486 = vmatpush1.msra.mxu0 0.0
        %487 = vmatprep.subr.mxu0 0.0
        %488 = vmatpush1.msra.mxu0 0.0
        %489 = vmatprep.subr.mxu0 0.0
        %490 = vmatpush1.msra.mxu0 0.0
        %491 = vmatprep.subr.mxu0 0.0
        %492 = vmatpush1.msra.mxu0 0.0
        %493 = vmatprep.subr.mxu0 0.0
        %494 = vmatpush1.msra.mxu0 0.0
        %495 = vmatprep.subr.mxu0 0.0
        %496 = vmatpush1.msra.mxu0 0.0
        %497 = vmatprep.subr.mxu0 0.0
        %498 = vmatpush1.msra.mxu0 0.0
        %499 = vmatprep.subr.mxu0 0.0
        %500 = vmatpush1.msra.mxu0 0.0
        %501 = vmatprep.subr.mxu0 0.0
        %502 = vmatpush1.msra.mxu0 0.0
        %503 = vmatprep.subr.mxu0 0.0
        %504 = vmatpush1.msra.mxu0 0.0
        %505 = vmatprep.subr.mxu0 0.0
        %506 = vmatpush1.msra.mxu0 0.0
        %507 = vmatprep.subr.mxu0 0.0
        %508 = vmatpush1.msra.mxu0 0.0
        %509 = vmatprep.subr.mxu0 0.0
        %510 = vmatpush1.msra.mxu0 0.0
        %511 = vmatprep.subr.mxu0 0.0
        %512 = vmatpush1.msra.mxu0 0.0
        %513 = vmatprep.subr.mxu0 0.0
        %514 = vmatpush1.msra.mxu0 0.0
        %515 = vmatprep.mubr.f32.mxu0 0.0
        %516 = vmatmul.mubr.f32.gmra.mrb[0].mxu0 %v364
        %v517 = vpop.f32.mrb[0].mxu0
        %v518 = vadd.f32 0.0, %v517
        %v519 = vpop.f32.mrb[0].mxu0
        %520 = vmatprep.mubr.f32.mxu0 0.0
        %521 = vmatmul.mubr.f32.gmra.mrb[0].mxu0 %v365
        %v522 = vpop.f32.mrb[0].mxu0
        %v523 = vadd.f32 0.0, %v522
        %v524 = vpop.f32.mrb[0].mxu0
        %525 = vdwg.mxu0
        %526 = vmatprep.subr.mxu0 0.0
        %527 = vmatpush1.msra.mxu0 %v419
        %528 = vmatprep.subr.mxu0 0.0
        %529 = vmatpush1.msra.mxu0 %v420
        %530 = vmatprep.subr.mxu0 0.0
        %531 = vmatpush1.msra.mxu0 %v421
        %532 = vmatprep.subr.mxu0 0.0
        %533 = vmatpush1.msra.mxu0 %v422
        %534 = vmatprep.subr.mxu0 0.0
        %535 = vmatpush1.msra.mxu0 %v423
        %536 = vmatprep.subr.mxu0 0.0
        %537 = vmatpush1.msra.mxu0 %v424
        %538 = vmatprep.subr.mxu0 0.0
        %539 = vmatpush1.msra.mxu0 %v425
        %540 = vmatprep.subr.mxu0 0.0
        %541 = vmatpush1.msra.mxu0 %v426
        %542 = vmatprep.subr.mxu0 0.0
        %543 = vmatpush1.msra.mxu0 %v427
        %544 = vmatprep.subr.mxu0 0.0
        %545 = vmatpush1.msra.mxu0 %v428
        %546 = vmatprep.subr.mxu0 0.0
        %547 = vmatpush1.msra.mxu0 %v429
        %548 = vmatprep.subr.mxu0 0.0
        %549 = vmatpush1.msra.mxu0 %v430
        %550 = vmatprep.subr.mxu0 0.0
        %551 = vmatpush1.msra.mxu0 %v431
        %552 = vmatprep.subr.mxu0 0.0
        %553 = vmatpush1.msra.mxu0 %v432
        %554 = vmatprep.subr.mxu0 0.0
        %555 = vmatpush1.msra.mxu0 %v433
        %556 = vmatprep.subr.mxu0 0.0
        %557 = vmatpush1.msra.mxu0 %v434
        %558 = vmatprep.subr.mxu0 0.0
        %559 = vmatpush1.msra.mxu0 0.0
        %560 = vmatprep.subr.mxu0 0.0
        %561 = vmatpush1.msra.mxu0 0.0
        %562 = vmatprep.subr.mxu0 0.0
        %563 = vmatpush1.msra.mxu0 0.0
        %564 = vmatprep.subr.mxu0 0.0
        %565 = vmatpush1.msra.mxu0 0.0
        %566 = vmatprep.subr.mxu0 0.0
        %567 = vmatpush1.msra.mxu0 0.0
        %568 = vmatprep.subr.mxu0 0.0
        %569 = vmatpush1.msra.mxu0 0.0
        %570 = vmatprep.subr.mxu0 0.0
        %571 = vmatpush1.msra.mxu0 0.0
        %572 = vmatprep.subr.mxu0 0.0
        %573 = vmatpush1.msra.mxu0 0.0
        %574 = vmatprep.subr.mxu0 0.0
        %575 = vmatpush1.msra.mxu0 0.0
        %576 = vmatprep.subr.mxu0 0.0
        %577 = vmatpush1.msra.mxu0 0.0
        %578 = vmatprep.subr.mxu0 0.0
        %579 = vmatpush1.msra.mxu0 0.0
        %580 = vmatprep.subr.mxu0 0.0
        %581 = vmatpush1.msra.mxu0 0.0
        %582 = vmatprep.subr.mxu0 0.0
        %583 = vmatpush1.msra.mxu0 0.0
        %584 = vmatprep.subr.mxu0 0.0
        %585 = vmatpush1.msra.mxu0 0.0
        %586 = vmatprep.subr.mxu0 0.0
        %587 = vmatpush1.msra.mxu0 0.0
        %588 = vmatprep.subr.mxu0 0.0
        %589 = vmatpush1.msra.mxu0 0.0
        %590 = vmatprep.mubr.f32.mxu0 0.0
        %591 = vmatmul.mubr.f32.gmra.mrb[0].mxu0 %v410
        %v592 = vpop.f32.mrb[0].mxu0
        %v593 = vadd.f32 %v518, %v592
        %v594 = vpop.f32.mrb[0].mxu0
        %595 = vmatprep.mubr.f32.mxu0 0.0
        %596 = vmatmul.mubr.f32.gmra.mrb[0].mxu0 %v411
        %v597 = vpop.f32.mrb[0].mxu0
        %v598 = vadd.f32 %v523, %v597
        %v599 = vpop.f32.mrb[0].mxu0
        %600 = vdwg.mxu0
        %v601 = vld [vmem:[#allocation2 + $0x100] sm:$0xff]
        %v602 = vld [vmem:[#allocation2 + $0x108] sm:$0xff]
        %v603 = vld [vmem:[#allocation2 + $0x110] sm:$0xff]
        %v604 = vld [vmem:[#allocation2 + $0x118] sm:$0xff]
        %v605 = vld [vmem:[#allocation2 + $0x120] sm:$0xff]
        %v606 = vld [vmem:[#allocation2 + $0x128] sm:$0xff]
        %v607 = vld [vmem:[#allocation2 + $0x130] sm:$0xff]
        %v608 = vld [vmem:[#allocation2 + $0x138] sm:$0xff]
        %v609 = vld [vmem:[#allocation2 + $0x140] sm:$0xff]
        %v610 = vld [vmem:[#allocation2 + $0x148] sm:$0xff]
        %v611 = vld [vmem:[#allocation2 + $0x150] sm:$0xff]
        %v612 = vld [vmem:[#allocation2 + $0x158] sm:$0xff]
        %v613 = vld [vmem:[#allocation2 + $0x160] sm:$0xff]
        %v614 = vld [vmem:[#allocation2 + $0x168] sm:$0xff]
        %v615 = vld [vmem:[#allocation2 + $0x170] sm:$0xff]
        %v616 = vld [vmem:[#allocation2 + $0x178] sm:$0xff]
        %617 = vmatprep.subr.mxu0 0.0
        %618 = vmatpush1.msra.mxu0 %v601
        %619 = vmatprep.subr.mxu0 0.0
        %620 = vmatpush1.msra.mxu0 %v602
        %621 = vmatprep.subr.mxu0 0.0
        %622 = vmatpush1.msra.mxu0 %v603
        %623 = vmatprep.subr.mxu0 0.0
        %624 = vmatpush1.msra.mxu0 %v604
        %625 = vmatprep.subr.mxu0 0.0
        %626 = vmatpush1.msra.mxu0 %v605
        %627 = vmatprep.subr.mxu0 0.0
        %628 = vmatpush1.msra.mxu0 %v606
        %629 = vmatprep.subr.mxu0 0.0
        %630 = vmatpush1.msra.mxu0 %v607
        %631 = vmatprep.subr.mxu0 0.0
        %632 = vmatpush1.msra.mxu0 %v608
        %633 = vmatprep.subr.mxu0 0.0
        %634 = vmatpush1.msra.mxu0 %v609
        %635 = vmatprep.subr.mxu0 0.0
        %636 = vmatpush1.msra.mxu0 %v610
        %637 = vmatprep.subr.mxu0 0.0
        %638 = vmatpush1.msra.mxu0 %v611
        %639 = vmatprep.subr.mxu0 0.0
        %640 = vmatpush1.msra.mxu0 %v612
        %641 = vmatprep.subr.mxu0 0.0
        %642 = vmatpush1.msra.mxu0 %v613
        %643 = vmatprep.subr.mxu0 0.0
        %644 = vmatpush1.msra.mxu0 %v614
        %645 = vmatprep.subr.mxu0 0.0
        %646 = vmatpush1.msra.mxu0 %v615
        %647 = vmatprep.subr.mxu0 0.0
        %648 = vmatpush1.msra.mxu0 %v616
        %649 = vmatprep.subr.mxu0 0.0
        %650 = vmatpush1.msra.mxu0 0.0
        %651 = vmatprep.subr.mxu0 0.0
        %652 = vmatpush1.msra.mxu0 0.0
        %653 = vmatprep.subr.mxu0 0.0
        %654 = vmatpush1.msra.mxu0 0.0
        %655 = vmatprep.subr.mxu0 0.0
        %656 = vmatpush1.msra.mxu0 0.0
        %657 = vmatprep.subr.mxu0 0.0
        %658 = vmatpush1.msra.mxu0 0.0
        %659 = vmatprep.subr.mxu0 0.0
        %660 = vmatpush1.msra.mxu0 0.0
        %661 = vmatprep.subr.mxu0 0.0
        %662 = vmatpush1.msra.mxu0 0.0
        %663 = vmatprep.subr.mxu0 0.0
        %664 = vmatpush1.msra.mxu0 0.0
        %665 = vmatprep.subr.mxu0 0.0
        %666 = vmatpush1.msra.mxu0 0.0
        %667 = vmatprep.subr.mxu0 0.0
        %668 = vmatpush1.msra.mxu0 0.0
        %669 = vmatprep.subr.mxu0 0.0
        %670 = vmatpush1.msra.mxu0 0.0
        %671 = vmatprep.subr.mxu0 0.0
        %672 = vmatpush1.msra.mxu0 0.0
        %673 = vmatprep.subr.mxu0 0.0
        %674 = vmatpush1.msra.mxu0 0.0
        %675 = vmatprep.subr.mxu0 0.0
        %676 = vmatpush1.msra.mxu0 0.0
        %677 = vmatprep.subr.mxu0 0.0
        %678 = vmatpush1.msra.mxu0 0.0
        %679 = vmatprep.subr.mxu0 0.0
        %680 = vmatpush1.msra.mxu0 0.0
        %681 = vmatprep.mubr.f32.mxu0 0.0
        %682 = vmatmul.mubr.f32.gmra.mrb[0].mxu0 %v417
        %v683 = vpop.f32.mrb[0].mxu0
        %v684 = vadd.f32 0.0, %v683
        %v685 = vpop.f32.mrb[0].mxu0
        %686 = vmatprep.mubr.f32.mxu0 0.0
        %687 = vmatmul.mubr.f32.gmra.mrb[0].mxu0 %v418
        %v688 = vpop.f32.mrb[0].mxu0
        %v689 = vadd.f32 0.0, %v688
        %v690 = vpop.f32.mrb[0].mxu0
        %691 = vdwg.mxu0
        %v692 = vadd.f32 %v593, %v684
        %v693 = vadd.f32 %v598, %v689
        %v694 = vld [vmem:[%s5] sm:$0x1]
        %v696 = vlaneseq
        %v697 = vshrl.u32 %v696, 7
        %v698 = vsub.s32 0, %v697
        %v699 = vrot.slane %v694, %v698
        %v701 = vadd.f32 %v692, %v699
        %v702 = vadd.f32 %v693, %v699
        %v703 = vxor.u32 %v701, 2147483648
        %v704 = vxor.u32 %v702, 2147483648
        %v705 = vmul.f32 %v703, 1.442695
        %v706 = vpow.pop %v705
        %v707 = vmul.f32 %v704, 1.442695
        %v708 = vpow.pop %v707
        %v709 = vadd.f32 %v706, 1.0
        %v710 = vadd.f32 %v708, 1.0
        %v711 = vrcp.pop %v709
        %v712 = vmul.f32 1.0, %v711
        %v713 = vrcp.pop %v710
        %v714 = vmul.f32 1.0, %v713
        %v715 = vmul.f32 %v701, %v712
        %v716 = vmul.f32 %v702, %v714
        %v717 = vld [vmem:[#allocation5] sm:$0xff]
        %v718 = vld [vmem:[#allocation5 + $0x8] sm:$0xff]
        %v719 = vld [vmem:[#allocation5 + $0x10] sm:$0xff]
        %v720 = vld [vmem:[#allocation5 + $0x18] sm:$0xff]
        %v721 = vld [vmem:[#allocation5 + $0x20] sm:$0xff]
        %v722 = vld [vmem:[#allocation5 + $0x28] sm:$0xff]
        %v723 = vld [vmem:[#allocation5 + $0x30] sm:$0xff]
        %v724 = vld [vmem:[#allocation5 + $0x38] sm:$0xff]
        %v725 = vld [vmem:[#allocation5 + $0x40] sm:$0xff]
        %v726 = vld [vmem:[#allocation5 + $0x48] sm:$0xff]
        %v727 = vld [vmem:[#allocation5 + $0x50] sm:$0xff]
        %v728 = vld [vmem:[#allocation5 + $0x58] sm:$0xff]
        %v729 = vld [vmem:[#allocation5 + $0x60] sm:$0xff]
        %v730 = vld [vmem:[#allocation5 + $0x68] sm:$0xff]
        %v731 = vld [vmem:[#allocation5 + $0x70] sm:$0xff]
        %v732 = vld [vmem:[#allocation5 + $0x78] sm:$0xff]
        %733 = vmatprep.subr.mxu0 0.0
        %734 = vmatpush1.msra.mxu0 %v717
        %735 = vmatprep.subr.mxu0 0.0
        %736 = vmatpush1.msra.mxu0 %v718
        %737 = vmatprep.subr.mxu0 0.0
        %738 = vmatpush1.msra.mxu0 %v719
        %739 = vmatprep.subr.mxu0 0.0
        %740 = vmatpush1.msra.mxu0 %v720
        %741 = vmatprep.subr.mxu0 0.0
        %742 = vmatpush1.msra.mxu0 %v721
        %743 = vmatprep.subr.mxu0 0.0
        %744 = vmatpush1.msra.mxu0 %v722
        %745 = vmatprep.subr.mxu0 0.0
        %746 = vmatpush1.msra.mxu0 %v723
        %747 = vmatprep.subr.mxu0 0.0
        %748 = vmatpush1.msra.mxu0 %v724
        %749 = vmatprep.subr.mxu0 0.0
        %750 = vmatpush1.msra.mxu0 %v725
        %751 = vmatprep.subr.mxu0 0.0
        %752 = vmatpush1.msra.mxu0 %v726
        %753 = vmatprep.subr.mxu0 0.0
        %754 = vmatpush1.msra.mxu0 %v727
        %755 = vmatprep.subr.mxu0 0.0
        %756 = vmatpush1.msra.mxu0 %v728
        %757 = vmatprep.subr.mxu0 0.0
        %758 = vmatpush1.msra.mxu0 %v729
        %759 = vmatprep.subr.mxu0 0.0
        %760 = vmatpush1.msra.mxu0 %v730
        %761 = vmatprep.subr.mxu0 0.0
        %762 = vmatpush1.msra.mxu0 %v731
        %763 = vmatprep.subr.mxu0 0.0
        %764 = vmatpush1.msra.mxu0 %v732
        %765 = vmatprep.subr.mxu0 0.0
        %766 = vmatpush1.msra.mxu0 0.0
        %767 = vmatprep.subr.mxu0 0.0
        %768 = vmatpush1.msra.mxu0 0.0
        %769 = vmatprep.subr.mxu0 0.0
        %770 = vmatpush1.msra.mxu0 0.0
        %771 = vmatprep.subr.mxu0 0.0
        %772 = vmatpush1.msra.mxu0 0.0
        %773 = vmatprep.subr.mxu0 0.0
        %774 = vmatpush1.msra.mxu0 0.0
        %775 = vmatprep.subr.mxu0 0.0
        %776 = vmatpush1.msra.mxu0 0.0
        %777 = vmatprep.subr.mxu0 0.0
        %778 = vmatpush1.msra.mxu0 0.0
        %779 = vmatprep.subr.mxu0 0.0
        %780 = vmatpush1.msra.mxu0 0.0
        %781 = vmatprep.subr.mxu0 0.0
        %782 = vmatpush1.msra.mxu0 0.0
        %783 = vmatprep.subr.mxu0 0.0
        %784 = vmatpush1.msra.mxu0 0.0
        %785 = vmatprep.subr.mxu0 0.0
        %786 = vmatpush1.msra.mxu0 0.0
        %787 = vmatprep.subr.mxu0 0.0
        %788 = vmatpush1.msra.mxu0 0.0
        %789 = vmatprep.subr.mxu0 0.0
        %790 = vmatpush1.msra.mxu0 0.0
        %791 = vmatprep.subr.mxu0 0.0
        %792 = vmatpush1.msra.mxu0 0.0
        %793 = vmatprep.subr.mxu0 0.0
        %794 = vmatpush1.msra.mxu0 0.0
        %795 = vmatprep.subr.mxu0 0.0
        %796 = vmatpush1.msra.mxu0 0.0
        %797 = vmatprep.mubr.f32.mxu0 0.0
        %798 = vmatmul.mubr.f32.gmra.mrb[0].mxu0 %v715
        %v799 = vpop.f32.mrb[0].mxu0
        %v800 = vadd.f32 0.0, %v799
        %v801 = vpop.f32.mrb[0].mxu0
        %802 = vmatprep.mubr.f32.mxu0 0.0
        %803 = vmatmul.mubr.f32.gmra.mrb[0].mxu0 %v716
        %v804 = vpop.f32.mrb[0].mxu0
        %v805 = vadd.f32 0.0, %v804
        %v806 = vpop.f32.mrb[0].mxu0
        %807 = vdwg.mxu0
        %808 = vst [vmem:[%s318] sm:$0xff] %v800
        %809 = vst [vmem:[%s318 + $0x8] sm:$0xff] %v805
        %s810 = sand.u32 %s188, 1
        %s811 = scalar_lea.sflag [#allocation4], %s810
        %s812 = sand.u32 %s188, 1
        %s813 = smul.addr %s812, 16
        %s814 = scalar_lea.vmem [#allocation7], %s813
        // Predicated region
        $region57: #{tpu_custom_call.1} parent=47 // pred_check
          %p815 = pneg %p198
        $region58: #{tpu_custom_call.1} parent=47 // pred_check_branch
          %817 = sbr.rel (%p815) target = $region60
        $region59: #{tpu_custom_call.1} parent=47 // pred_region
          %s818 = smul.u32 2, %s23
          %s820 = ssub.s32 256, 256
          %821 = vsyncadd %s811, %s820
          %s822 = smul.addr %s818, 128
          %s823 = scalar_lea.hbm %s7, %s822
          %s824 = sshll.u32 %s814, 4
          %s825 = int_to_ptr.vmem [resolvable:$true] %s824
          %830 = dma.vmem_to_hbm [thread:$0]  %s825, 256, %s823, %s811, 128, 128, 8
        $region60: #{tpu_custom_call.1} parent=47 // pred_fallthru
          _
      $region48: #{tpu_custom_call.1} parent=5 // pred_fallthru
        _
      %p831 = scmp.le.s32.totalorder 2, %s18
      // Predicated region
      $region61: #{tpu_custom_call.1} parent=5 // pred_check
        %p832 = pneg %p831
      $region62: #{tpu_custom_call.1} parent=5 // pred_check_branch
        %834 = sbr.rel (%p832) target = $region64
      $region63: #{tpu_custom_call.1} parent=5 // pred_region
        %s835 = ssub.s32 %s18, 2
        // Predicated region
        $region65: #{tpu_custom_call.1} parent=63 // pred_check
          %p836 = pneg %p204
        $region66: #{tpu_custom_call.1} parent=63 // pred_check_branch
          %838 = sbr.rel (%p836) target = $region68
        $region67: #{tpu_custom_call.1} parent=63 // pred_region
          %s839 = sand.u32 %s189, 1
          %s840 = scalar_lea.sflag [#allocation4], %s839
          %s841 = sand.u32 %s189, 1
          %s842 = smul.addr %s841, 16
          %s843 = scalar_lea.vmem [#allocation7], %s842
          %844 = dma.done %s840, 256
        $region68: #{tpu_custom_call.1} parent=63 // pred_fallthru
          _
      $region64: #{tpu_custom_call.1} parent=5 // pred_fallthru
        _
    $region6: #{tpu_custom_call.1} parent=1 // loop_footer
      %s22 = sadd.s32 1, %s18
    $region7: #{tpu_custom_call.1} parent=1 // loop_footer_branch
      %17 = sbr.rel target = $region3
    $region8: #{tpu_custom_call.1} parent=1 // loop_exit
      _
    %845 = vsyncpa [#allocation3], 1
    %s846 = scalar_lea.sflag [#allocation3], 1
    %847 = vsyncpa %s846, 1
    %848 = vsyncpa [#allocation6], 1
    %849 = vsyncpa [#allocation4], 1
    %s850 = scalar_lea.sflag [#allocation4], 1
    %851 = vsyncpa %s850, 1

</llo_original>
